<compile_context>
chip_gen: v7x
topology: tpu7x:2x2x1
jax: 0.10.0
libtpu: 0.0.40
codegen_flags: <defaults>
</compile_context>

<pallas_src>
import jax
import jax.numpy as jnp
from jax.experimental import pallas as pl
from jax.experimental.pallas import tpu as pltpu

_LANE = 128                      # TPU lane width (fast axis)
_TARGET_BLOCK_BYTES = 2 << 20    # ~2 MiB per block: safe on v5e/v6e/v7x


def _copy_kernel(x_ref, o_ref):
    # Full-tile, lane-dense pass-through of the current (block_rows, 128) tile.
    o_ref[...] = x_ref[...]


def _lane_dense_copy(x):
    """Identity copy of `x` through VMEM using a lane-dense (rows, 128) view."""
    orig_shape = x.shape
    itemsize = jnp.dtype(x.dtype).itemsize

    flat = x.reshape(-1)
    n = flat.shape[0]

    # Rows of 128 lanes each.
    rows = -(-n // _LANE)

    # Block rows: ~2 MiB per block, multiple of 8 (sublane), at least 8.
    target_rows = max(8, _TARGET_BLOCK_BYTES // (_LANE * itemsize))
    block_rows = max(8, (min(target_rows, rows) // 8) * 8)
    # Prefer >=2 grid blocks when there is enough data (keeps both v7x TCs busy).
    if rows >= 16:
        block_rows = min(block_rows, max(8, ((rows // 2) // 8) * 8))

    # Pad so rows is an exact multiple of block_rows (keeps the (8,128)
    # divisibility constraint satisfied for every tile).
    padded_rows = -(-rows // block_rows) * block_rows
    padded_n = padded_rows * _LANE
    if padded_n != n:
        flat = jnp.pad(flat, (0, padded_n - n))
    x2d = flat.reshape(padded_rows, _LANE)

    grid = (padded_rows // block_rows,)
    bytes_accessed = 2 * padded_n * itemsize  # read + write

    out2d = pl.pallas_call(
        _copy_kernel,
        out_shape=jax.ShapeDtypeStruct((padded_rows, _LANE), x.dtype),
        grid_spec=pltpu.PrefetchScalarGridSpec(
            num_scalar_prefetch=0,
            grid=grid,
            in_specs=[pl.BlockSpec((block_rows, _LANE), lambda r: (r, 0))],
            out_specs=pl.BlockSpec((block_rows, _LANE), lambda r: (r, 0)),
        ),
        compiler_params=pltpu.CompilerParams(
            dimension_semantics=("parallel",),
        ),
        cost_estimate=pl.CostEstimate(
            flops=0, transcendentals=0, bytes_accessed=bytes_accessed),
    )(x2d)

    out_flat = out2d.reshape(-1)
    if padded_n != n:
        out_flat = out_flat[:n]
    return out_flat.reshape(orig_shape)


def vqpc_forward(batch, use_kernel=True):
    """Pallas implementation of VQPC.forward.

    batch: dict with key 'motion' -> jnp.ndarray of shape [B, T, D].
    Returns the 'inputs' tensor exactly as the PyTorch forward holds it.

    use_kernel=False is the production path (the visible forward is a pure
    pass-through, so the fastest correct implementation is no kernel at all);
    use_kernel=True routes through the lane-dense staging copy kernel.
    """
    motion = batch["motion"]
    if not use_kernel:
        return motion
    return _lane_dense_copy(motion)


if __name__ == "__main__":
    key = jax.random.PRNGKey(0)
    B, T, D = 2, 8, 32  # small synthetic motion sequence: [batch, time, feat]
    motion = jax.random.normal(key, (B, T, D), dtype=jnp.float32)

    batch = {"motion": motion}
    inputs = vqpc_forward(batch, use_kernel=True)
    jax.block_until_ready(inputs)

    # Verify identity semantics of the visible forward body.
    assert inputs.shape == motion.shape
    assert inputs.dtype == motion.dtype
    assert bool(jnp.allclose(inputs, motion))

    # Zero-cost production path must agree as well.
    passthrough = vqpc_forward(batch, use_kernel=False)
    assert bool(jnp.allclose(passthrough, motion))

    print("KERNEL_OK")
</pallas_src>

<mosaic_0001>
module attributes {stable_mosaic.version = 11 : i64} {
  func.func @_copy_kernel(%arg0: i32, %arg1: memref<8x128xf32, #tpu.memory_space<vmem>>, %arg2: memref<8x128xf32, #tpu.memory_space<vmem>>) attributes {dimension_semantics = [#tpu.dimension_semantics<parallel>], iteration_bounds = array<i64: 1>, scalar_prefetch = 0 : i64, scratch_operands = 0 : i64, tpu.core_type = #tpu.core_type<tc>, window_params = [{transform_indices = @transform_0, window_bounds = array<i64: 8, 128>}, {transform_indices = @transform_1, window_bounds = array<i64: 8, 128>}]} {
    %c0 = arith.constant 0 : index
    %c0_0 = arith.constant 0 : index
    %0 = vector.load %arg1[%c0, %c0_0] : memref<8x128xf32, #tpu.memory_space<vmem>>, vector<8x128xf32>
    %c0_1 = arith.constant 0 : index
    %c0_2 = arith.constant 0 : index
    %1 = vector.load %arg2[%c0_1, %c0_2] : memref<8x128xf32, #tpu.memory_space<vmem>>, vector<8x128xf32>
    tpu.vector_store %arg2[%c0_1, %c0_2], %0 {strides = array<i32>} : memref<8x128xf32, #tpu.memory_space<vmem>>, vector<8x128xf32>,
    return
  }
  func.func @transform_0(%arg0: i32) -> (i32, i32) {
    %c0_i32 = arith.constant 0 : i32
    %c0_i32_0 = arith.constant 0 : i32
    return %arg0, %c0_i32 : i32, i32
  }
  func.func @transform_1(%arg0: i32) -> (i32, i32) {
    %c0_i32 = arith.constant 0 : i32
    %c0_i32_0 = arith.constant 0 : i32
    return %arg0, %c0_i32 : i32, i32
  }
}

</mosaic_0001>

<llo_original>
// kernel: tpu_custom_call.1
$region0: #{tpu_custom_call.1}
  #allocation0 [shape = 'u32[]', space=smem, size = 0x4, offset = 0x4, fixed_abs, tag = 'smem constant byte address 0x4 - core index']
  #allocation1 [shape = 'u32[144,128]{1,0:T(1,128)}', space=vmem, size = 0x12000, scoped, tag = 'internal scratch']
  %s0 = inlined_call_operand.hbm [shape: f32[8,128], index: 0, kind: input, shape index: {}]
  %s1 = inlined_call_operand.hbm [shape: f32[8,128], index: 1, kind: output, shape index: {}]
  %s2 = sld [smem:[#allocation0]]
  $region18: #{tpu_custom_call.1} parent=0
    _
  %s4 = ssub.s32 1, %s2
  %s5 = scalar_select 0, %s4, %s2
  $region1: #{tpu_custom_call.1} parent=0
    #allocation2 [shape = 'u8[4096]{0}', space=vmem, size = 0x1000, scoped, tag = 'input window, operand 0, single buffered']
    #allocation3 [shape = 's32[1]{0}', space=sflag, size = 0x4, scoped, tag = 'scoped memory for tpu_custom_call.1']
    #allocation4 [shape = 's32[1]{0}', space=sflag, size = 0x4, scoped, tag = 'scoped memory for tpu_custom_call.1']
    #allocation5 [shape = 'u8[4096]{0}', space=vmem, size = 0x1000, scoped, tag = 'output window, operand 0, single buffered']
    %6 = vsyncpa [#allocation3], 0
    %7 = vsyncpa [#allocation4], 0
    // Predicated region
    $region2: #{tpu_custom_call.1} parent=1 // pred_check
      _
    $region3: #{tpu_custom_call.1} parent=1 // pred_check_branch
      %9 = sbr.rel (0) target = $region5
    $region4: #{tpu_custom_call.1} parent=1 // pred_region
      %s11 = ssub.s32 128, 128
      %12 = vsyncadd [#allocation3], %s11
      %s14 = sshll.u32 [#allocation2], 4
      %s15 = int_to_ptr.vmem [resolvable:$true] %s14
      %17 = dma.hbm_to_vmem [thread:$0]  %s0, 128, %s15, [#allocation3]
    $region5: #{tpu_custom_call.1} parent=1 // pred_fallthru
      _
    // Predicated region
    $region6: #{tpu_custom_call.1} parent=1 // pred_check
      _
    $region7: #{tpu_custom_call.1} parent=1 // pred_check_branch
      %19 = sbr.rel (0) target = $region9
    $region8: #{tpu_custom_call.1} parent=1 // pred_region
      %20 = dma.done [#allocation3], 128
    $region9: #{tpu_custom_call.1} parent=1 // pred_fallthru
      _
    %v21 = vld [vmem:[#allocation2] sm:$0xff]
    %22 = vst [vmem:[#allocation5] sm:$0xff] %v21
    // Predicated region
    $region10: #{tpu_custom_call.1} parent=1 // pred_check
      _
    $region11: #{tpu_custom_call.1} parent=1 // pred_check_branch
      %24 = sbr.rel (0) target = $region13
    $region12: #{tpu_custom_call.1} parent=1 // pred_region
      %s26 = ssub.s32 128, 128
      %27 = vsyncadd [#allocation4], %s26
      %s29 = sshll.u32 [#allocation5], 4
      %s30 = int_to_ptr.vmem [resolvable:$true] %s29
      %32 = dma.vmem_to_hbm [thread:$0]  %s30, 128, %s1, [#allocation4]
    $region13: #{tpu_custom_call.1} parent=1 // pred_fallthru
      _
    // Predicated region
    $region14: #{tpu_custom_call.1} parent=1 // pred_check
      _
    $region15: #{tpu_custom_call.1} parent=1 // pred_check_branch
      %34 = sbr.rel (0) target = $region17
    $region16: #{tpu_custom_call.1} parent=1 // pred_region
      %35 = dma.done [#allocation4], 128
    $region17: #{tpu_custom_call.1} parent=1 // pred_fallthru
      _
    %36 = vsyncpa [#allocation3], 1
    %37 = vsyncpa [#allocation4], 1

</llo_original>
